<compile_context>
chip_gen: v7x
topology: tpu7x:2x2x1
jax: 0.10.0
libtpu: 0.0.40
codegen_flags: <defaults>
</compile_context>

<pallas_src>
import functools
import math

import jax
import jax.numpy as jnp
from jax.experimental import pallas as pl
from jax.experimental.pallas import tpu as pltpu


# ----------------------------------------------------------------------------
# Kernel
# ----------------------------------------------------------------------------
def _self_attention_kernel(k_ref, q_ref, v_ref, o_ref, *, matmul_dtype):
    """One grid step = a block of `tb` heads.

    Block shapes:
      k_ref: (tb, Lk, Dk)   q_ref: (tb, Lq, Dk)   v_ref: (tb, Lq, Dv)
      o_ref: (1, Lk, tb*Dv) -- heads folded into the lane axis (lane-dense).
    """
    tb, _, dk = k_ref.shape
    dv = v_ref.shape[-1]

    compute_dtype = matmul_dtype if matmul_dtype is not None else k_ref.dtype
    inv_sqrt_dk = jnp.float32(1.0 / math.sqrt(dk))

    k = k_ref[...]
    # Fold the 1/sqrt(d_k) scale into q: O(L*D) VPU work instead of O(L*L)
    # on the scores tile.
    q = (q_ref[...].astype(jnp.float32) * inv_sqrt_dk).astype(compute_dtype)
    v = v_ref[...]

    # scores[h] = k[h] @ q[h]^T / sqrt(d_k)  -> (tb, Lk, Lq).
    # Contraction is on the LAST dim of BOTH operands: no q transpose /
    # XLU relayout is materialized before the MXU push.
    scores = jnp.einsum("hkd,hqd->hkq", k, q,
                        preferred_element_type=jnp.float32)

    # Numerically stable softmax over the last (q) axis. Normalization is
    # deferred until after the second matmul (multiply O(Lk*Dv) elements,
    # not O(Lk*Lq)).
    m = jnp.max(scores, axis=-1, keepdims=True)
    e = jnp.exp(scores - m)
    denom = jnp.sum(e, axis=-1, keepdims=True)            # (tb, Lk, 1)

    # out[h] = softmax(scores[h]) @ v[h]  -> (tb, Lk, Dv), f32 accumulation.
    out = jnp.einsum("hkq,hqd->hkd", e.astype(compute_dtype), v,
                     preferred_element_type=jnp.float32)
    out = out * pl.reciprocal(denom, approx=True)          # EUP slot

    # Lane-dense store: fold the tb heads into the last axis -> (Lk, tb*Dv).
    # tb is small (<= 16), so a single concat over static slices is cheap and
    # lowers robustly.
    o_ref[0] = jnp.concatenate([out[h] for h in range(tb)],
                               axis=-1).astype(o_ref.dtype)


# ----------------------------------------------------------------------------
# VMEM sizing helpers (lane/sublane padding aware, generation aware)
# ----------------------------------------------------------------------------
def _vmem_capacity_bytes():
    """Physical VMEM per TensorCore; falls back to 128 MiB (v5e/v6e)."""
    try:
        cap = int(pltpu.get_tpu_info().vmem_capacity_bytes)
        if cap > 0:
            return cap
    except Exception:
        pass
    return 128 * 1024 * 1024


def _padded_tile_bytes(rows, cols, itemsize):
    """VMEM tile size: sublane dim pads to 8, lane dim pads to 128."""
    prow = -(-rows // 8) * 8
    pcol = -(-cols // 128) * 128
    return prow * pcol * itemsize


def _step_vmem_bytes(tb, lk, lq, dk, dv, in_itemsize, out_itemsize):
    """Per-grid-step VMEM footprint estimate (padding included)."""
    # Double-buffered input tiles (leading head dim is not lane/sublane padded).
    io = 2 * tb * (_padded_tile_bytes(lk, dk, in_itemsize)
                   + _padded_tile_bytes(lq, dk, in_itemsize)
                   + _padded_tile_bytes(lq, dv, in_itemsize))
    # Double-buffered lane-folded output tile.
    io += 2 * _padded_tile_bytes(lk, tb * dv, out_itemsize)
    # f32 temporaries: scaled q, scores, exp(scores), unnormalized out,
    # plus the folded (Lk, tb*Dv) staging value before the store.
    tmp = tb * (_padded_tile_bytes(lq, dk, 4)
                + 2 * _padded_tile_bytes(lk, lq, 4)
                + _padded_tile_bytes(lk, dv, 4))
    tmp += _padded_tile_bytes(lk, tb * dv, 4)
    return io + tmp


def _choose_head_block(bh, lk, lq, dk, dv, in_itemsize, out_itemsize,
                       budget_bytes, min_grid, max_tb=16):
    """Largest divisor of bh that fits `budget_bytes`, keeps the grid >=
    min_grid steps, and keeps the per-step unroll small (max_tb)."""
    best = 1
    for tb in range(1, bh + 1):
        if bh % tb:
            continue
        if tb > max_tb:
            break
        if bh // tb < min_grid:
            break
        if _step_vmem_bytes(tb, lk, lq, dk, dv,
                            in_itemsize, out_itemsize) > budget_bytes:
            break  # footprint is monotone in tb
        best = tb
    return best


# ----------------------------------------------------------------------------
# Wrapper
# ----------------------------------------------------------------------------
def self_attention(k, q, v, *, head_block=None, matmul_dtype=None,
                   unfold_heads=True):
    """k: (..., Lk, Dk), q: (..., Lq, Dk), v: (..., Lq, Dv) -> (..., Lk, Dv).

    If unfold_heads=False, returns the head-folded lane-dense layout
    (nb, Lk, tb*Dv) and skips an extra full HBM read+write of the output.
    """
    assert k.shape[:-2] == q.shape[:-2] == v.shape[:-2]
    assert k.shape[-1] == q.shape[-1]
    assert q.shape[-2] == v.shape[-2]

    batch_dims = k.shape[:-2]
    bh = math.prod(batch_dims) if batch_dims else 1
    Lk, Dk = k.shape[-2:]
    Lq = q.shape[-2]
    Dv = v.shape[-1]
    out_dtype = k.dtype

    k3 = k.reshape(bh, Lk, Dk)
    q3 = q.reshape(bh, Lq, Dk)
    v3 = v.reshape(bh, Lq, Dv)

    # Wrapper-side low-precision cast: halves HBM->VMEM DMA bytes for this
    # mem-bound shape regime and doubles MXU rate on v6e/v7x. f32 accumulation
    # is preserved inside the kernel via preferred_element_type.
    if matmul_dtype is not None:
        k3 = k3.astype(matmul_dtype)
        q3 = q3.astype(matmul_dtype)
        v3 = v3.astype(matmul_dtype)

    in_itemsize = jnp.dtype(k3.dtype).itemsize
    out_itemsize = jnp.dtype(out_dtype).itemsize

    # Generation-aware budgets: ~30% of physical VMEM for the pipelined tiles.
    vmem_cap = _vmem_capacity_bytes()
    tile_budget = (3 * vmem_cap) // 10

    # Keep at least 2 grid steps so v7x's two TensorCores both get work and
    # the DMA/compute pipeline has something to overlap.
    min_grid = min(2, bh)

    if head_block is not None:
        tb = head_block
    else:
        tb = _choose_head_block(bh, Lk, Lq, Dk, Dv, in_itemsize, out_itemsize,
                                tile_budget, min_grid)
    assert bh % tb == 0, (bh, tb)
    nb = bh // tb

    footprint = _step_vmem_bytes(tb, Lk, Lq, Dk, Dv, in_itemsize, out_itemsize)
    # Scoped-VMEM request: enough headroom for the chosen tiles, never more
    # than half the physical VMEM (valid on v7x's 64 MiB parts).
    vmem_limit = int(min(vmem_cap // 2,
                         max(16 * 1024 * 1024, 2 * footprint)))

    cost = pl.CostEstimate(
        flops=2 * bh * (Lk * Lq * Dk + Lk * Lq * Dv),
        transcendentals=bh * Lk * Lq,
        bytes_accessed=(in_itemsize * bh * (Lk * Dk + Lq * Dk + Lq * Dv)
                        + out_itemsize * bh * Lk * Dv),
    )

    out3 = pl.pallas_call(
        functools.partial(_self_attention_kernel, matmul_dtype=matmul_dtype),
        out_shape=jax.ShapeDtypeStruct((nb, Lk, tb * Dv), out_dtype),
        grid_spec=pltpu.PrefetchScalarGridSpec(
            num_scalar_prefetch=0,
            grid=(nb,),
            in_specs=[
                pl.BlockSpec((tb, Lk, Dk), lambda b: (b, 0, 0)),
                pl.BlockSpec((tb, Lq, Dk), lambda b: (b, 0, 0)),
                pl.BlockSpec((tb, Lq, Dv), lambda b: (b, 0, 0)),
            ],
            out_specs=pl.BlockSpec((1, Lk, tb * Dv), lambda b: (b, 0, 0)),
        ),
        compiler_params=pltpu.CompilerParams(
            dimension_semantics=("parallel",),
            vmem_limit_bytes=vmem_limit,
        ),
        cost_estimate=cost,
    )(k3, q3, v3)

    if not unfold_heads:
        # Head-folded lane-dense layout (nb, Lk, tb*Dv); consumer fuses unfold.
        return out3

    # Undo the lane-dense head fold (pure layout plumbing, done in XLA).
    out = (out3.reshape(nb, Lk, tb, Dv)
                .transpose(0, 2, 1, 3)
                .reshape(bh, Lk, Dv))
    return out.reshape(*batch_dims, Lk, Dv)


def _reference(k, q, v):
    d_k = q.shape[-1]
    scores = jnp.matmul(k, jnp.swapaxes(q, -2, -1)) / math.sqrt(d_k)
    p = jax.nn.softmax(scores, axis=-1)
    return jnp.matmul(p, v)


if __name__ == "__main__":
    # Small shapes consistent with the module's forward (module has no params).
    B, H, L, D = 2, 4, 8, 32
    key = jax.random.PRNGKey(0)
    kk, kq, kv = jax.random.split(key, 3)
    k = jax.random.normal(kk, (B, H, L, D), dtype=jnp.float32)
    q = jax.random.normal(kq, (B, H, L, D), dtype=jnp.float32)
    v = jax.random.normal(kv, (B, H, L, D), dtype=jnp.float32)

    out = self_attention(k, q, v)
    out = jax.block_until_ready(out)

    ref = _reference(k, q, v)
    assert out.shape == ref.shape, (out.shape, ref.shape)
    # Tolerance accounts for the EUP approximate reciprocal in the softmax
    # normalization (applied once to the (Lk, Dv) output).
    assert jnp.allclose(out, ref, atol=2e-3, rtol=2e-3), (
        "mismatch vs reference, max abs err = "
        f"{float(jnp.max(jnp.abs(out - ref)))}")

    print("KERNEL_OK")
</pallas_src>

<mosaic_0001>
module attributes {stable_mosaic.version = 11 : i64} {
  func.func @_self_attention_kernel(%arg0: i32, %arg1: memref<4x8x32xf32, #tpu.memory_space<vmem>>, %arg2: memref<4x8x32xf32, #tpu.memory_space<vmem>>, %arg3: memref<4x8x32xf32, #tpu.memory_space<vmem>>, %arg4: memref<1x8x128xf32, #tpu.memory_space<vmem>>) attributes {dimension_semantics = [#tpu.dimension_semantics<parallel>], iteration_bounds = array<i64: 2>, scalar_prefetch = 0 : i64, scratch_operands = 0 : i64, tpu.core_type = #tpu.core_type<tc>, window_params = [{transform_indices = @transform_0, window_bounds = array<i64: 4, 8, 32>}, {transform_indices = @transform_1, window_bounds = array<i64: 4, 8, 32>}, {transform_indices = @transform_2, window_bounds = array<i64: 4, 8, 32>}, {transform_indices = @transform_3, window_bounds = array<i64: 1, 8, 128>}]} {
    %c0 = arith.constant 0 : index
    %c0_0 = arith.constant 0 : index
    %c0_1 = arith.constant 0 : index
    %0 = vector.load %arg1[%c0, %c0_0, %c0_1] : memref<4x8x32xf32, #tpu.memory_space<vmem>>, vector<4x8x32xf32>
    %c0_2 = arith.constant 0 : index
    %c0_3 = arith.constant 0 : index
    %c0_4 = arith.constant 0 : index
    %1 = vector.load %arg2[%c0_2, %c0_3, %c0_4] : memref<4x8x32xf32, #tpu.memory_space<vmem>>, vector<4x8x32xf32>
    %cst = arith.constant 0.176776692 : f32
    %2 = vector.broadcast %cst : f32 to vector<4x8x32xf32>
    %3 = arith.mulf %1, %2 : vector<4x8x32xf32>
    %c0_5 = arith.constant 0 : index
    %c0_6 = arith.constant 0 : index
    %c0_7 = arith.constant 0 : index
    %4 = vector.load %arg3[%c0_5, %c0_6, %c0_7] : memref<4x8x32xf32, #tpu.memory_space<vmem>>, vector<4x8x32xf32>
    "tpu.trace_start"() <{level = 10 : i32, message = "hkd,hqd->hkq"}> : () -> ()
    %cst_8 = arith.constant dense<0.000000e+00> : vector<4x8x8xf32>
    %5 = tpu.matmul %0, %3, %cst_8 {dimension_numbers = #tpu.dot_dimension_numbers<[2], [2], [1], [1], [0, 0, 0, 1, 1, 1], [0], [0]>} : vector<4x8x32xf32>, vector<4x8x32xf32>, vector<4x8x8xf32> -> vector<4x8x8xf32>
    "tpu.trace_stop"() : () -> ()
    %cst_9 = arith.constant dense<0xFF800000> : vector<4x8xf32>
    %6 = vector.multi_reduction <maximumf>, %5, %cst_9 [2] : vector<4x8x8xf32> to vector<4x8xf32>
    %7 = vector.shape_cast %6 : vector<4x8xf32> to vector<4x8x1xf32>
    %8 = vector.broadcast %7 : vector<4x8x1xf32> to vector<4x8x8xf32>
    %9 = arith.subf %5, %8 : vector<4x8x8xf32>
    %10 = math.exp %9 : vector<4x8x8xf32>
    %cst_10 = arith.constant dense<0.000000e+00> : vector<4x8xf32>
    %11 = vector.multi_reduction <add>, %10, %cst_10 [2] : vector<4x8x8xf32> to vector<4x8xf32>
    %12 = vector.shape_cast %11 : vector<4x8xf32> to vector<4x8x1xf32>
    "tpu.trace_start"() <{level = 10 : i32, message = "hkq,hqd->hkd"}> : () -> ()
    %cst_11 = arith.constant dense<0.000000e+00> : vector<4x8x32xf32>
    %13 = tpu.matmul %10, %4, %cst_11 {dimension_numbers = #tpu.dot_dimension_numbers<[2], [1], [1], [2], [0, 0, 0, 1, 1, 2], [0], [0]>} : vector<4x8x8xf32>, vector<4x8x32xf32>, vector<4x8x32xf32> -> vector<4x8x32xf32>
    "tpu.trace_stop"() : () -> ()
    %14 = tpu.reciprocal %12 {approx = true} : vector<4x8x1xf32> -> vector<4x8x1xf32>
    %15 = vector.broadcast %14 : vector<4x8x1xf32> to vector<4x8x32xf32>
    %16 = arith.mulf %13, %15 : vector<4x8x32xf32>
    %17 = vector.extract_strided_slice %16 {offsets = [0, 0, 0], sizes = [1, 8, 32], strides = [1, 1, 1]} : vector<4x8x32xf32> to vector<1x8x32xf32>
    %18 = vector.shape_cast %17 : vector<1x8x32xf32> to vector<8x32xf32>
    %19 = vector.extract_strided_slice %16 {offsets = [1, 0, 0], sizes = [1, 8, 32], strides = [1, 1, 1]} : vector<4x8x32xf32> to vector<1x8x32xf32>
    %20 = vector.shape_cast %19 : vector<1x8x32xf32> to vector<8x32xf32>
    %21 = vector.extract_strided_slice %16 {offsets = [2, 0, 0], sizes = [1, 8, 32], strides = [1, 1, 1]} : vector<4x8x32xf32> to vector<1x8x32xf32>
    %22 = vector.shape_cast %21 : vector<1x8x32xf32> to vector<8x32xf32>
    %23 = vector.extract_strided_slice %16 {offsets = [3, 0, 0], sizes = [1, 8, 32], strides = [1, 1, 1]} : vector<4x8x32xf32> to vector<1x8x32xf32>
    %24 = vector.shape_cast %23 : vector<1x8x32xf32> to vector<8x32xf32>
    %25 = tpu.concatenate %18, %20, %22, %24 in 1 : vector<8x32xf32>, vector<8x32xf32>, vector<8x32xf32>, vector<8x32xf32> -> vector<8x128xf32>
    %c0_12 = arith.constant 0 : index
    %c0_13 = arith.constant 0 : index
    %c0_14 = arith.constant 0 : index
    %26 = vector.load %arg4[%c0_12, %c0_13, %c0_14] : memref<1x8x128xf32, #tpu.memory_space<vmem>>, vector<1x8x128xf32>
    %27 = vector.shape_cast %26 : vector<1x8x128xf32> to vector<8x128xf32>
    %28 = vector.shape_cast %25 : vector<8x128xf32> to vector<1x8x128xf32>
    tpu.vector_store %arg4[%c0_12, %c0_13, %c0_14], %28 {strides = array<i32>} : memref<1x8x128xf32, #tpu.memory_space<vmem>>, vector<1x8x128xf32>,
    return
  }
  func.func @transform_0(%arg0: i32) -> (i32, i32, i32) {
    %c0_i32 = arith.constant 0 : i32
    %c0_i32_0 = arith.constant 0 : i32
    %c0_i32_1 = arith.constant 0 : i32
    return %arg0, %c0_i32, %c0_i32_0 : i32, i32, i32
  }
  func.func @transform_1(%arg0: i32) -> (i32, i32, i32) {
    %c0_i32 = arith.constant 0 : i32
    %c0_i32_0 = arith.constant 0 : i32
    %c0_i32_1 = arith.constant 0 : i32
    return %arg0, %c0_i32, %c0_i32_0 : i32, i32, i32
  }
  func.func @transform_2(%arg0: i32) -> (i32, i32, i32) {
    %c0_i32 = arith.constant 0 : i32
    %c0_i32_0 = arith.constant 0 : i32
    %c0_i32_1 = arith.constant 0 : i32
    return %arg0, %c0_i32, %c0_i32_0 : i32, i32, i32
  }
  func.func @transform_3(%arg0: i32) -> (i32, i32, i32) {
    %c0_i32 = arith.constant 0 : i32
    %c0_i32_0 = arith.constant 0 : i32
    %c0_i32_1 = arith.constant 0 : i32
    return %arg0, %c0_i32, %c0_i32_0 : i32, i32, i32
  }
}

</mosaic_0001>

<llo_original>
// kernel: tpu_custom_call.1
$region0: #{tpu_custom_call.1}
  #allocation0 [shape = 'u32[]', space=smem, size = 0x4, offset = 0x4, fixed_abs, tag = 'smem constant byte address 0x4 - core index']
  #allocation1 [shape = 'u32[144,128]{1,0:T(1,128)}', space=vmem, size = 0x12000, scoped, tag = 'internal scratch']
  %s0 = inlined_call_operand.hbm [shape: f32[8,8,32], index: 0, kind: input, shape index: {}]
  %s1 = inlined_call_operand.hbm [shape: f32[8,8,32], index: 1, kind: input, shape index: {}]
  %s2 = inlined_call_operand.hbm [shape: f32[8,8,32], index: 2, kind: input, shape index: {}]
  %s3 = inlined_call_operand.hbm [shape: f32[2,8,128], index: 3, kind: output, shape index: {}]
  %s4 = sld [smem:[#allocation0]]
  $region57: #{tpu_custom_call.1} parent=0
    _
  %s6 = ssub.s32 1, %s4
  %s7 = scalar_select 0, %s6, %s4
  $region1: #{tpu_custom_call.1} parent=0
    #allocation2 [shape = 'u8[32768]{0}', space=vmem, size = 0x8000, scoped, tag = 'input window, operand 0']
    #allocation3 [shape = 's32[2]{0}', space=sflag, size = 0x8, scoped, tag = 'scoped memory for tpu_custom_call.1']
    #allocation4 [shape = 's32[2]{0}', space=sflag, size = 0x8, scoped, tag = 'scoped memory for tpu_custom_call.1']
    #allocation5 [shape = 'u8[32768]{0}', space=vmem, size = 0x8000, scoped, tag = 'input window, operand 1']
    #allocation6 [shape = 's32[2]{0}', space=sflag, size = 0x8, scoped, tag = 'scoped memory for tpu_custom_call.1']
    #allocation7 [shape = 'u8[32768]{0}', space=vmem, size = 0x8000, scoped, tag = 'input window, operand 2']
    #allocation8 [shape = 'u8[8192]{0}', space=vmem, size = 0x2000, scoped, tag = 'output window, operand 0']
    %8 = vsyncpa [#allocation3], 0
    %s9 = scalar_lea.sflag [#allocation3], 1
    %10 = vsyncpa %s9, 0
    %11 = vsyncpa [#allocation6], 0
    %s12 = scalar_lea.sflag [#allocation6], 1
    %13 = vsyncpa %s12, 0
    %14 = vsyncpa [#allocation4], 0
    %s15 = scalar_lea.sflag [#allocation4], 1
    %16 = vsyncpa %s15, 0
    loop: start=0, step=1, limit=4
    $region2: #{tpu_custom_call.1} parent=1 // loop_pre_header
      _
    $region3: #{tpu_custom_call.1} parent=1 // loop_header
      %s18 = sphi 0, %s22
      %p19 = scmp.ge.s32.totalorder %s18, 4
      %s28 = sphi 0, %s30
      %s31 = sphi 0, %s28
      %s32 = sphi 0, %s31
      %s48 = sphi 0, %s32
      %s54 = sphi 0, %s56
      %s57 = sphi 0, %s54
      %s58 = sphi 0, %s57
      %s74 = sphi 0, %s58
      %s80 = sphi 0, %s82
      %s83 = sphi 0, %s80
      %s84 = sphi 0, %s83
      %s100 = sphi 0, %s84
      %s106 = sphi 0, %s108
      %s109 = sphi 0, %s106
      %s110 = sphi 0, %s109
      %s126 = sphi 0, %s110
    $region4: #{tpu_custom_call.1} parent=1 // loop_header_branch
      %21 = sbr.rel (%p19) target = $region8
    $region5: #{tpu_custom_call.1} parent=1 // loop_body
      %s23 = ssub.s32 %s18, 1
      %s24 = ssub.s32 %s18, 2
      %s25 = sadd.s32 %s18, 1
      %s26 = ssub.s32 %s18, %s25
      %p27 = scmp.eq.s32.totalorder %s26, 0
      %s29 = sadd.s32 %s28, 1
      %s30 = scalar_select %p27, %s28, %s29
      %p33 = pneg %p27
      %p34 = scmp.eq.s32.totalorder %s18, 1
      %p35 = por %p33, %p34
      %p36 = scmp.ne.s32.totalorder %s28, %s31
      %p37 = scmp.eq.s32.totalorder %s18, 0
      %p38 = por %p36, %p37
      %p39 = scmp.ne.s32.totalorder %s28, %s31
      %p40 = scmp.eq.s32.totalorder %s23, 1
      %p41 = por %p39, %p40
      %p42 = scmp.ne.s32.totalorder %s31, %s32
      %p43 = scmp.eq.s32.totalorder %s23, 0
      %p44 = por %p42, %p43
      %p45 = scmp.ne.s32.totalorder %s31, %s32
      %p46 = scmp.eq.s32.totalorder %s24, 1
      %p47 = por %p45, %p46
      %p49 = scmp.ne.s32.totalorder %s32, %s48
      %p50 = scmp.eq.s32.totalorder %s24, 0
      %p51 = por %p49, %p50
      %s52 = ssub.s32 %s18, %s25
      %p53 = scmp.eq.s32.totalorder %s52, 0
      %s55 = sadd.s32 %s54, 1
      %s56 = scalar_select %p53, %s54, %s55
      %p59 = pneg %p53
      %p60 = scmp.eq.s32.totalorder %s18, 1
      %p61 = por %p59, %p60
      %p62 = scmp.ne.s32.totalorder %s54, %s57
      %p63 = scmp.eq.s32.totalorder %s18, 0
      %p64 = por %p62, %p63
      %p65 = scmp.ne.s32.totalorder %s54, %s57
      %p66 = scmp.eq.s32.totalorder %s23, 1
      %p67 = por %p65, %p66
      %p68 = scmp.ne.s32.totalorder %s57, %s58
      %p69 = scmp.eq.s32.totalorder %s23, 0
      %p70 = por %p68, %p69
      %p71 = scmp.ne.s32.totalorder %s57, %s58
      %p72 = scmp.eq.s32.totalorder %s24, 1
      %p73 = por %p71, %p72
      %p75 = scmp.ne.s32.totalorder %s58, %s74
      %p76 = scmp.eq.s32.totalorder %s24, 0
      %p77 = por %p75, %p76
      %s78 = ssub.s32 %s18, %s25
      %p79 = scmp.eq.s32.totalorder %s78, 0
      %s81 = sadd.s32 %s80, 1
      %s82 = scalar_select %p79, %s80, %s81
      %p85 = pneg %p79
      %p86 = scmp.eq.s32.totalorder %s18, 1
      %p87 = por %p85, %p86
      %p88 = scmp.ne.s32.totalorder %s80, %s83
      %p89 = scmp.eq.s32.totalorder %s18, 0
      %p90 = por %p88, %p89
      %p91 = scmp.ne.s32.totalorder %s80, %s83
      %p92 = scmp.eq.s32.totalorder %s23, 1
      %p93 = por %p91, %p92
      %p94 = scmp.ne.s32.totalorder %s83, %s84
      %p95 = scmp.eq.s32.totalorder %s23, 0
      %p96 = por %p94, %p95
      %p97 = scmp.ne.s32.totalorder %s83, %s84
      %p98 = scmp.eq.s32.totalorder %s24, 1
      %p99 = por %p97, %p98
      %p101 = scmp.ne.s32.totalorder %s84, %s100
      %p102 = scmp.eq.s32.totalorder %s24, 0
      %p103 = por %p101, %p102
      %s104 = ssub.s32 %s18, %s25
      %p105 = scmp.eq.s32.totalorder %s104, 0
      %s107 = sadd.s32 %s106, 1
      %s108 = scalar_select %p105, %s106, %s107
      %p111 = pneg %p105
      %p112 = scmp.eq.s32.totalorder %s18, 1
      %p113 = por %p111, %p112
      %p114 = scmp.ne.s32.totalorder %s106, %s109
      %p115 = scmp.eq.s32.totalorder %s18, 0
      %p116 = por %p114, %p115
      %p117 = scmp.ne.s32.totalorder %s106, %s109
      %p118 = scmp.eq.s32.totalorder %s23, 1
      %p119 = por %p117, %p118
      %p120 = scmp.ne.s32.totalorder %s109, %s110
      %p121 = scmp.eq.s32.totalorder %s23, 0
      %p122 = por %p120, %p121
      %p123 = scmp.ne.s32.totalorder %s109, %s110
      %p124 = scmp.eq.s32.totalorder %s24, 1
      %p125 = por %p123, %p124
      %p127 = scmp.ne.s32.totalorder %s110, %s126
      %p128 = scmp.eq.s32.totalorder %s24, 0
      %p129 = por %p127, %p128
      %p130 = scmp.le.s32.totalorder 1, %s18
      %p131 = scmp.lt.s32.totalorder %s18, 3
      %p132 = pnand %p130, %p131
      %p133 = pneg %p132
      // Predicated region
      $region9: #{tpu_custom_call.1} parent=5 // pred_check
        _
      $region10: #{tpu_custom_call.1} parent=5 // pred_check_branch
        %135 = sbr.rel (%p132) target = $region12
      $region11: #{tpu_custom_call.1} parent=5 // pred_region
        %s136 = ssub.s32 %s18, 1
      $region12: #{tpu_custom_call.1} parent=5 // pred_fallthru
        _
      %p137 = scmp.lt.s32.totalorder %s18, 2
      // Predicated region
      $region13: #{tpu_custom_call.1} parent=5 // pred_check
        %p138 = pneg %p137
      $region14: #{tpu_custom_call.1} parent=5 // pred_check_branch
        %140 = sbr.rel (%p138) target = $region16
      $region15: #{tpu_custom_call.1} parent=5 // pred_region
        // Predicated region
        $region17: #{tpu_custom_call.1} parent=15 // pred_check
          %p141 = pneg %p38
        $region18: #{tpu_custom_call.1} parent=15 // pred_check_branch
          %143 = sbr.rel (%p141) target = $region20
        $region19: #{tpu_custom_call.1} parent=15 // pred_region
          %s144 = sand.u32 %s28, 1
          %s145 = scalar_lea.sflag [#allocation3], %s144
          %s146 = sand.u32 %s28, 1
          %s147 = smul.addr %s146, 32
          %s148 = scalar_lea.vmem [#allocation2], %s147
          %s149 = smul.u32 4, %s18
          %s151 = ssub.s32 512, 512
          %152 = vsyncadd %s145, %s151
          %s153 = smul.addr %s149, 128
          %s154 = scalar_lea.hbm %s0, %s153
          %s155 = sshll.u32 %s148, 4
          %s156 = int_to_ptr.vmem [resolvable:$true] %s155
          %161 = dma.hbm_to_vmem [thread:$0]  %s154, 512, %s156, %s145, 128, 128, 8
        $region20: #{tpu_custom_call.1} parent=15 // pred_fallthru
          _
        // Predicated region
        $region21: #{tpu_custom_call.1} parent=15 // pred_check
          %p162 = pneg %p64
        $region22: #{tpu_custom_call.1} parent=15 // pred_check_branch
          %164 = sbr.rel (%p162) target = $region24
        $region23: #{tpu_custom_call.1} parent=15 // pred_region
          %s165 = sand.u32 %s18, 1
          %s166 = scalar_lea.sflag [#allocation6], %s165
          %s167 = sand.u32 %s54, 1
          %s168 = smul.addr %s167, 32
          %s169 = scalar_lea.vmem [#allocation5], %s168
          %s170 = smul.u32 4, %s18
          %s172 = ssub.s32 512, 512
          %173 = vsyncadd %s166, %s172
          %s174 = smul.addr %s170, 128
          %s175 = scalar_lea.hbm %s1, %s174
          %s176 = sshll.u32 %s169, 4
          %s177 = int_to_ptr.vmem [resolvable:$true] %s176
          %182 = dma.hbm_to_vmem [thread:$0]  %s175, 512, %s177, %s166, 128, 128, 8
        $region24: #{tpu_custom_call.1} parent=15 // pred_fallthru
          _
        // Predicated region
        $region25: #{tpu_custom_call.1} parent=15 // pred_check
          %p183 = pneg %p90
        $region26: #{tpu_custom_call.1} parent=15 // pred_check_branch
          %185 = sbr.rel (%p183) target = $region28
        $region27: #{tpu_custom_call.1} parent=15 // pred_region
          %s186 = sand.u32 %s18, 1
          %s187 = scalar_lea.sflag [#allocation6], %s186
          %s188 = sand.u32 %s80, 1
          %s189 = smul.addr %s188, 32
          %s190 = scalar_lea.vmem [#allocation7], %s189
          %s191 = smul.u32 4, %s18
          %s193 = ssub.s32 512, 512
          %194 = vsyncadd %s187, %s193
          %s195 = smul.addr %s191, 128
          %s196 = scalar_lea.hbm %s2, %s195
          %s197 = sshll.u32 %s190, 4
          %s198 = int_to_ptr.vmem [resolvable:$true] %s197
          %203 = dma.hbm_to_vmem [thread:$0]  %s196, 512, %s198, %s187, 128, 128, 8
        $region28: #{tpu_custom_call.1} parent=15 // pred_fallthru
          _
      $region16: #{tpu_custom_call.1} parent=5 // pred_fallthru
        _
      %p204 = scmp.le.s32.totalorder 1, %s18
      %p205 = scmp.lt.s32.totalorder %s18, 3
      %p206 = pnand %p204, %p205
      %p207 = pneg %p206
      // Predicated region
      $region29: #{tpu_custom_call.1} parent=5 // pred_check
        _
      $region30: #{tpu_custom_call.1} parent=5 // pred_check_branch
        %209 = sbr.rel (%p206) target = $region32
      $region31: #{tpu_custom_call.1} parent=5 // pred_region
        %s210 = ssub.s32 %s18, 1
        %s211 = sand.u32 %s31, 1
        %s212 = scalar_lea.sflag [#allocation3], %s211
        %s213 = sand.u32 %s31, 1
        %s214 = smul.addr %s213, 32
        %s215 = scalar_lea.vmem [#allocation2], %s214
        // Predicated region
        $region33: #{tpu_custom_call.1} parent=31 // pred_check
          %p216 = pneg %p44
        $region34: #{tpu_custom_call.1} parent=31 // pred_check_branch
          %218 = sbr.rel (%p216) target = $region36
        $region35: #{tpu_custom_call.1} parent=31 // pred_region
          %219 = dma.done %s212, 512
        $region36: #{tpu_custom_call.1} parent=31 // pred_fallthru
          _
        %s220 = sand.u32 %s23, 1
        %s221 = scalar_lea.sflag [#allocation6], %s220
        %s222 = sand.u32 %s57, 1
        %s223 = smul.addr %s222, 32
        %s224 = scalar_lea.vmem [#allocation5], %s223
        // Predicated region
        $region37: #{tpu_custom_call.1} parent=31 // pred_check
          %p225 = pneg %p70
        $region38: #{tpu_custom_call.1} parent=31 // pred_check_branch
          %227 = sbr.rel (%p225) target = $region40
        $region39: #{tpu_custom_call.1} parent=31 // pred_region
          %228 = dma.done %s221, 512
        $region40: #{tpu_custom_call.1} parent=31 // pred_fallthru
          _
        %s229 = sand.u32 %s23, 1
        %s230 = scalar_lea.sflag [#allocation6], %s229
        %s231 = sand.u32 %s83, 1
        %s232 = smul.addr %s231, 32
        %s233 = scalar_lea.vmem [#allocation7], %s232
        // Predicated region
        $region41: #{tpu_custom_call.1} parent=31 // pred_check
          %p234 = pneg %p96
        $region42: #{tpu_custom_call.1} parent=31 // pred_check_branch
          %236 = sbr.rel (%p234) target = $region44
        $region43: #{tpu_custom_call.1} parent=31 // pred_region
          %237 = dma.done %s230, 512
        $region44: #{tpu_custom_call.1} parent=31 // pred_fallthru
          _
        %s238 = sand.u32 %s31, 1
        %s239 = scalar_lea.sflag [#allocation3], %s238
        %s240 = sand.u32 %s31, 1
        %s241 = smul.addr %s240, 32
        %s242 = scalar_lea.vmem [#allocation2], %s241
        %p243 = pneg %p44
        %p244 = pneg %p41
        %s245 = sand.u32 %s23, 1
        %s246 = scalar_lea.sflag [#allocation6], %s245
        %s247 = sand.u32 %s57, 1
        %s248 = smul.addr %s247, 32
        %s249 = scalar_lea.vmem [#allocation5], %s248
        %p250 = pneg %p70
        %p251 = pneg %p67
        %s252 = sand.u32 %s23, 1
        %s253 = scalar_lea.sflag [#allocation6], %s252
        %s254 = sand.u32 %s83, 1
        %s255 = smul.addr %s254, 32
        %s256 = scalar_lea.vmem [#allocation7], %s255
        %p257 = pneg %p96
        %p258 = pneg %p93
        %p259 = pneg %p122
        %p260 = pneg %p119
        %s261 = sand.u32 %s109, 1
        %s262 = scalar_lea.sflag [#allocation4], %s261
        %s263 = sand.u32 %s109, 1
        %s264 = smul.addr %s263, 8
        %s265 = scalar_lea.vmem [#allocation8], %s264
        %s266 = smul.u32 4, %s23
        %s267 = smul.u32 4, %s23
        %s268 = smul.u32 4, %s23
        %v269 = vld [vmem:[%s215] sm:$0xff]
        %v270 = vld [vmem:[%s215 + $0x8] sm:$0xff]
        %v271 = vld [vmem:[%s215 + $0x10] sm:$0xff]
        %v272 = vld [vmem:[%s215 + $0x18] sm:$0xff]
        %v273 = vld [vmem:[%s224] sm:$0xff]
        %v274 = vld [vmem:[%s224 + $0x8] sm:$0xff]
        %v275 = vld [vmem:[%s224 + $0x10] sm:$0xff]
        %v276 = vld [vmem:[%s224 + $0x18] sm:$0xff]
        %v277 = vmul.f32 %v273, 0.17677669
        %v278 = vmul.f32 %v274, 0.17677669
        %v279 = vmul.f32 %v275, 0.17677669
        %v280 = vmul.f32 %v276, 0.17677669
        %v281 = vld [vmem:[%s233] sm:$0xff]
        %v282 = vld [vmem:[%s233 + $0x8] sm:$0xff]
        %v283 = vld [vmem:[%s233 + $0x10] sm:$0xff]
        %v284 = vld [vmem:[%s233 + $0x18] sm:$0xff]
        %vm285 = vcmask 261120
        %v287 = vsel %vm285, %v269, 0
        %v290 = vsel %vm285, %v277, 0
        %292 = vmatprep.subr.mxu0 0.0
        %293 = vmatpush1.xpose.msra.mxu0 %v290
        %294 = vmatprep.subr.mxu0 0.0
        %295 = vmatpush1.xpose.msra.mxu0 0.0
        %296 = vmatprep.subr.mxu0 0.0
        %297 = vmatpush1.xpose.msra.mxu0 0.0
        %298 = vmatprep.subr.mxu0 0.0
        %299 = vmatpush1.xpose.msra.mxu0 0.0
        %300 = vmatprep.subr.mxu0 0.0
        %301 = vmatpush1.xpose.msra.mxu0 0.0
        %302 = vmatprep.subr.mxu0 0.0
        %303 = vmatpush1.xpose.msra.mxu0 0.0
        %304 = vmatprep.subr.mxu0 0.0
        %305 = vmatpush1.xpose.msra.mxu0 0.0
        %306 = vmatprep.subr.mxu0 0.0
        %307 = vmatpush1.xpose.msra.mxu0 0.0
        %308 = vmatprep.subr.mxu0 0.0
        %309 = vmatpush1.xpose.msra.mxu0 0.0
        %310 = vmatprep.subr.mxu0 0.0
        %311 = vmatpush1.xpose.msra.mxu0 0.0
        %312 = vmatprep.subr.mxu0 0.0
        %313 = vmatpush1.xpose.msra.mxu0 0.0
        %314 = vmatprep.subr.mxu0 0.0
        %315 = vmatpush1.xpose.msra.mxu0 0.0
        %316 = vmatprep.subr.mxu0 0.0
        %317 = vmatpush1.xpose.msra.mxu0 0.0
        %318 = vmatprep.subr.mxu0 0.0
        %319 = vmatpush1.xpose.msra.mxu0 0.0
        %320 = vmatprep.subr.mxu0 0.0
        %321 = vmatpush1.xpose.msra.mxu0 0.0
        %322 = vmatprep.subr.mxu0 0.0
        %323 = vmatpush1.xpose.msra.mxu0 0.0
        %324 = vmatprep.subr.mxu0 0.0
        %325 = vmatpush1.xpose.msra.mxu0 0.0
        %326 = vmatprep.subr.mxu0 0.0
        %327 = vmatpush1.xpose.msra.mxu0 0.0
        %328 = vmatprep.subr.mxu0 0.0
        %329 = vmatpush1.xpose.msra.mxu0 0.0
        %330 = vmatprep.subr.mxu0 0.0
        %331 = vmatpush1.xpose.msra.mxu0 0.0
        %332 = vmatprep.subr.mxu0 0.0
        %333 = vmatpush1.xpose.msra.mxu0 0.0
        %334 = vmatprep.subr.mxu0 0.0
        %335 = vmatpush1.xpose.msra.mxu0 0.0
        %336 = vmatprep.subr.mxu0 0.0
        %337 = vmatpush1.xpose.msra.mxu0 0.0
        %338 = vmatprep.subr.mxu0 0.0
        %339 = vmatpush1.xpose.msra.mxu0 0.0
        %340 = vmatprep.subr.mxu0 0.0
        %341 = vmatpush1.xpose.msra.mxu0 0.0
        %342 = vmatprep.subr.mxu0 0.0
        %343 = vmatpush1.xpose.msra.mxu0 0.0
        %344 = vmatprep.subr.mxu0 0.0
        %345 = vmatpush1.xpose.msra.mxu0 0.0
        %346 = vmatprep.subr.mxu0 0.0
        %347 = vmatpush1.xpose.msra.mxu0 0.0
        %348 = vmatprep.subr.mxu0 0.0
        %349 = vmatpush1.xpose.msra.mxu0 0.0
        %350 = vmatprep.subr.mxu0 0.0
        %351 = vmatpush1.xpose.msra.mxu0 0.0
        %352 = vmatprep.subr.mxu0 0.0
        %353 = vmatpush1.xpose.msra.mxu0 0.0
        %354 = vmatprep.subr.mxu0 0.0
        %355 = vmatpush1.xpose.msra.mxu0 0.0
        %356 = vmatprep.mubr.f32.mxu0 0.0
        %357 = vmatmul.mubr.f32.gmra.mrb[0].mxu0 %v287
        %v358 = vpop.f32.mrb[0].mxu0
        %v359 = vadd.f32 0.0, %v358
        %v360 = vpop.f32.mrb[0].mxu0
        %361 = vdwg.mxu0
        %v363 = vsel %vm285, %v270, 0
        %v366 = vsel %vm285, %v278, 0
        %368 = vmatprep.subr.mxu0 0.0
        %369 = vmatpush1.xpose.msra.mxu0 %v366
        %370 = vmatprep.subr.mxu0 0.0
        %371 = vmatpush1.xpose.msra.mxu0 0.0
        %372 = vmatprep.subr.mxu0 0.0
        %373 = vmatpush1.xpose.msra.mxu0 0.0
        %374 = vmatprep.subr.mxu0 0.0
        %375 = vmatpush1.xpose.msra.mxu0 0.0
        %376 = vmatprep.subr.mxu0 0.0
        %377 = vmatpush1.xpose.msra.mxu0 0.0
        %378 = vmatprep.subr.mxu0 0.0
        %379 = vmatpush1.xpose.msra.mxu0 0.0
        %380 = vmatprep.subr.mxu0 0.0
        %381 = vmatpush1.xpose.msra.mxu0 0.0
        %382 = vmatprep.subr.mxu0 0.0
        %383 = vmatpush1.xpose.msra.mxu0 0.0
        %384 = vmatprep.subr.mxu0 0.0
        %385 = vmatpush1.xpose.msra.mxu0 0.0
        %386 = vmatprep.subr.mxu0 0.0
        %387 = vmatpush1.xpose.msra.mxu0 0.0
        %388 = vmatprep.subr.mxu0 0.0
        %389 = vmatpush1.xpose.msra.mxu0 0.0
        %390 = vmatprep.subr.mxu0 0.0
        %391 = vmatpush1.xpose.msra.mxu0 0.0
        %392 = vmatprep.subr.mxu0 0.0
        %393 = vmatpush1.xpose.msra.mxu0 0.0
        %394 = vmatprep.subr.mxu0 0.0
        %395 = vmatpush1.xpose.msra.mxu0 0.0
        %396 = vmatprep.subr.mxu0 0.0
        %397 = vmatpush1.xpose.msra.mxu0 0.0
        %398 = vmatprep.subr.mxu0 0.0
        %399 = vmatpush1.xpose.msra.mxu0 0.0
        %400 = vmatprep.subr.mxu0 0.0
        %401 = vmatpush1.xpose.msra.mxu0 0.0
        %402 = vmatprep.subr.mxu0 0.0
        %403 = vmatpush1.xpose.msra.mxu0 0.0
        %404 = vmatprep.subr.mxu0 0.0
        %405 = vmatpush1.xpose.msra.mxu0 0.0
        %406 = vmatprep.subr.mxu0 0.0
        %407 = vmatpush1.xpose.msra.mxu0 0.0
        %408 = vmatprep.subr.mxu0 0.0
        %409 = vmatpush1.xpose.msra.mxu0 0.0
        %410 = vmatprep.subr.mxu0 0.0
        %411 = vmatpush1.xpose.msra.mxu0 0.0
        %412 = vmatprep.subr.mxu0 0.0
        %413 = vmatpush1.xpose.msra.mxu0 0.0
        %414 = vmatprep.subr.mxu0 0.0
        %415 = vmatpush1.xpose.msra.mxu0 0.0
        %416 = vmatprep.subr.mxu0 0.0
        %417 = vmatpush1.xpose.msra.mxu0 0.0
        %418 = vmatprep.subr.mxu0 0.0
        %419 = vmatpush1.xpose.msra.mxu0 0.0
        %420 = vmatprep.subr.mxu0 0.0
        %421 = vmatpush1.xpose.msra.mxu0 0.0
        %422 = vmatprep.subr.mxu0 0.0
        %423 = vmatpush1.xpose.msra.mxu0 0.0
        %424 = vmatprep.subr.mxu0 0.0
        %425 = vmatpush1.xpose.msra.mxu0 0.0
        %426 = vmatprep.subr.mxu0 0.0
        %427 = vmatpush1.xpose.msra.mxu0 0.0
        %428 = vmatprep.subr.mxu0 0.0
        %429 = vmatpush1.xpose.msra.mxu0 0.0
        %430 = vmatprep.subr.mxu0 0.0
        %431 = vmatpush1.xpose.msra.mxu0 0.0
        %432 = vmatprep.mubr.f32.mxu0 0.0
        %433 = vmatmul.mubr.f32.gmra.mrb[0].mxu0 %v363
        %v434 = vpop.f32.mrb[0].mxu0
        %v435 = vadd.f32 0.0, %v434
        %v436 = vpop.f32.mrb[0].mxu0
        %437 = vdwg.mxu0
        %v439 = vsel %vm285, %v271, 0
        %v442 = vsel %vm285, %v279, 0
        %444 = vmatprep.subr.mxu0 0.0
        %445 = vmatpush1.xpose.msra.mxu0 %v442
        %446 = vmatprep.subr.mxu0 0.0
        %447 = vmatpush1.xpose.msra.mxu0 0.0
        %448 = vmatprep.subr.mxu0 0.0
        %449 = vmatpush1.xpose.msra.mxu0 0.0
        %450 = vmatprep.subr.mxu0 0.0
        %451 = vmatpush1.xpose.msra.mxu0 0.0
        %452 = vmatprep.subr.mxu0 0.0
        %453 = vmatpush1.xpose.msra.mxu0 0.0
        %454 = vmatprep.subr.mxu0 0.0
        %455 = vmatpush1.xpose.msra.mxu0 0.0
        %456 = vmatprep.subr.mxu0 0.0
        %457 = vmatpush1.xpose.msra.mxu0 0.0
        %458 = vmatprep.subr.mxu0 0.0
        %459 = vmatpush1.xpose.msra.mxu0 0.0
        %460 = vmatprep.subr.mxu0 0.0
        %461 = vmatpush1.xpose.msra.mxu0 0.0
        %462 = vmatprep.subr.mxu0 0.0
        %463 = vmatpush1.xpose.msra.mxu0 0.0
        %464 = vmatprep.subr.mxu0 0.0
        %465 = vmatpush1.xpose.msra.mxu0 0.0
        %466 = vmatprep.subr.mxu0 0.0
        %467 = vmatpush1.xpose.msra.mxu0 0.0
        %468 = vmatprep.subr.mxu0 0.0
        %469 = vmatpush1.xpose.msra.mxu0 0.0
        %470 = vmatprep.subr.mxu0 0.0
        %471 = vmatpush1.xpose.msra.mxu0 0.0
        %472 = vmatprep.subr.mxu0 0.0
        %473 = vmatpush1.xpose.msra.mxu0 0.0
        %474 = vmatprep.subr.mxu0 0.0
        %475 = vmatpush1.xpose.msra.mxu0 0.0
        %476 = vmatprep.subr.mxu0 0.0
        %477 = vmatpush1.xpose.msra.mxu0 0.0
        %478 = vmatprep.subr.mxu0 0.0
        %479 = vmatpush1.xpose.msra.mxu0 0.0
        %480 = vmatprep.subr.mxu0 0.0
        %481 = vmatpush1.xpose.msra.mxu0 0.0
        %482 = vmatprep.subr.mxu0 0.0
        %483 = vmatpush1.xpose.msra.mxu0 0.0
        %484 = vmatprep.subr.mxu0 0.0
        %485 = vmatpush1.xpose.msra.mxu0 0.0
        %486 = vmatprep.subr.mxu0 0.0
        %487 = vmatpush1.xpose.msra.mxu0 0.0
        %488 = vmatprep.subr.mxu0 0.0
        %489 = vmatpush1.xpose.msra.mxu0 0.0
        %490 = vmatprep.subr.mxu0 0.0
        %491 = vmatpush1.xpose.msra.mxu0 0.0
        %492 = vmatprep.subr.mxu0 0.0
        %493 = vmatpush1.xpose.msra.mxu0 0.0
        %494 = vmatprep.subr.mxu0 0.0
        %495 = vmatpush1.xpose.msra.mxu0 0.0
        %496 = vmatprep.subr.mxu0 0.0
        %497 = vmatpush1.xpose.msra.mxu0 0.0
        %498 = vmatprep.subr.mxu0 0.0
        %499 = vmatpush1.xpose.msra.mxu0 0.0
        %500 = vmatprep.subr.mxu0 0.0
        %501 = vmatpush1.xpose.msra.mxu0 0.0
        %502 = vmatprep.subr.mxu0 0.0
        %503 = vmatpush1.xpose.msra.mxu0 0.0
        %504 = vmatprep.subr.mxu0 0.0
        %505 = vmatpush1.xpose.msra.mxu0 0.0
        %506 = vmatprep.subr.mxu0 0.0
        %507 = vmatpush1.xpose.msra.mxu0 0.0
        %508 = vmatprep.mubr.f32.mxu0 0.0
        %509 = vmatmul.mubr.f32.gmra.mrb[0].mxu0 %v439
        %v510 = vpop.f32.mrb[0].mxu0
        %v511 = vadd.f32 0.0, %v510
        %v512 = vpop.f32.mrb[0].mxu0
        %513 = vdwg.mxu0
        %v515 = vsel %vm285, %v272, 0
        %v518 = vsel %vm285, %v280, 0
        %520 = vmatprep.subr.mxu0 0.0
        %521 = vmatpush1.xpose.msra.mxu0 %v518
        %522 = vmatprep.subr.mxu0 0.0
        %523 = vmatpush1.xpose.msra.mxu0 0.0
        %524 = vmatprep.subr.mxu0 0.0
        %525 = vmatpush1.xpose.msra.mxu0 0.0
        %526 = vmatprep.subr.mxu0 0.0
        %527 = vmatpush1.xpose.msra.mxu0 0.0
        %528 = vmatprep.subr.mxu0 0.0
        %529 = vmatpush1.xpose.msra.mxu0 0.0
        %530 = vmatprep.subr.mxu0 0.0
        %531 = vmatpush1.xpose.msra.mxu0 0.0
        %532 = vmatprep.subr.mxu0 0.0
        %533 = vmatpush1.xpose.msra.mxu0 0.0
        %534 = vmatprep.subr.mxu0 0.0
        %535 = vmatpush1.xpose.msra.mxu0 0.0
        %536 = vmatprep.subr.mxu0 0.0
        %537 = vmatpush1.xpose.msra.mxu0 0.0
        %538 = vmatprep.subr.mxu0 0.0
        %539 = vmatpush1.xpose.msra.mxu0 0.0
        %540 = vmatprep.subr.mxu0 0.0
        %541 = vmatpush1.xpose.msra.mxu0 0.0
        %542 = vmatprep.subr.mxu0 0.0
        %543 = vmatpush1.xpose.msra.mxu0 0.0
        %544 = vmatprep.subr.mxu0 0.0
        %545 = vmatpush1.xpose.msra.mxu0 0.0
        %546 = vmatprep.subr.mxu0 0.0
        %547 = vmatpush1.xpose.msra.mxu0 0.0
        %548 = vmatprep.subr.mxu0 0.0
        %549 = vmatpush1.xpose.msra.mxu0 0.0
        %550 = vmatprep.subr.mxu0 0.0
        %551 = vmatpush1.xpose.msra.mxu0 0.0
        %552 = vmatprep.subr.mxu0 0.0
        %553 = vmatpush1.xpose.msra.mxu0 0.0
        %554 = vmatprep.subr.mxu0 0.0
        %555 = vmatpush1.xpose.msra.mxu0 0.0
        %556 = vmatprep.subr.mxu0 0.0
        %557 = vmatpush1.xpose.msra.mxu0 0.0
        %558 = vmatprep.subr.mxu0 0.0
        %559 = vmatpush1.xpose.msra.mxu0 0.0
        %560 = vmatprep.subr.mxu0 0.0
        %561 = vmatpush1.xpose.msra.mxu0 0.0
        %562 = vmatprep.subr.mxu0 0.0
        %563 = vmatpush1.xpose.msra.mxu0 0.0
        %564 = vmatprep.subr.mxu0 0.0
        %565 = vmatpush1.xpose.msra.mxu0 0.0
        %566 = vmatprep.subr.mxu0 0.0
        %567 = vmatpush1.xpose.msra.mxu0 0.0
        %568 = vmatprep.subr.mxu0 0.0
        %569 = vmatpush1.xpose.msra.mxu0 0.0
        %570 = vmatprep.subr.mxu0 0.0
        %571 = vmatpush1.xpose.msra.mxu0 0.0
        %572 = vmatprep.subr.mxu0 0.0
        %573 = vmatpush1.xpose.msra.mxu0 0.0
        %574 = vmatprep.subr.mxu0 0.0
        %575 = vmatpush1.xpose.msra.mxu0 0.0
        %576 = vmatprep.subr.mxu0 0.0
        %577 = vmatpush1.xpose.msra.mxu0 0.0
        %578 = vmatprep.subr.mxu0 0.0
        %579 = vmatpush1.xpose.msra.mxu0 0.0
        %580 = vmatprep.subr.mxu0 0.0
        %581 = vmatpush1.xpose.msra.mxu0 0.0
        %582 = vmatprep.subr.mxu0 0.0
        %583 = vmatpush1.xpose.msra.mxu0 0.0
        %584 = vmatprep.mubr.f32.mxu0 0.0
        %585 = vmatmul.mubr.f32.gmra.mrb[0].mxu0 %v515
        %v586 = vpop.f32.mrb[0].mxu0
        %v587 = vadd.f32 0.0, %v586
        %v588 = vpop.f32.mrb[0].mxu0
        %589 = vdwg.mxu0
        %vm590 = vcmask 64512
        %v591 = vsel %vm590, %v359, -inf
        %592 = vmax.xlane.f32.xlu0 %v591
        %v593 = vpop.xlane.xlu0 %592
        %v594 = vsel %vm590, %v435, -inf
        %595 = vmax.xlane.f32.xlu0 %v594
        %v596 = vpop.xlane.xlu0 %595
        %v597 = vsel %vm590, %v511, -inf
        %598 = vmax.xlane.f32.xlu0 %v597
        %v599 = vpop.xlane.xlu0 %598
        %v600 = vsel %vm590, %v587, -inf
        %601 = vmax.xlane.f32.xlu0 %v600
        %v602 = vpop.xlane.xlu0 %601
        %v603 = vsub.f32 %v359, %v593
        %v604 = vsub.f32 %v435, %v596
        %v605 = vsub.f32 %v511, %v599
        %v606 = vsub.f32 %v587, %v602
        %v607 = vmul.f32 %v603, 1.442695
        %v608 = vpow.pop %v607
        %v609 = vmul.f32 %v604, 1.442695
        %v610 = vpow.pop %v609
        %v611 = vmul.f32 %v605, 1.442695
        %v612 = vpow.pop %v611
        %v613 = vmul.f32 %v606, 1.442695
        %v614 = vpow.pop %v613
        %v615 = vsel %vm590, %v608, 0.0
        %616 = vadd.xlane.f32.xlu0 %v615
        %v617 = vpop.xlane.xlu0 %616
        %v618 = vsel %vm590, %v610, 0.0
        %619 = vadd.xlane.f32.xlu0 %v618
        %v620 = vpop.xlane.xlu0 %619
        %v621 = vsel %vm590, %v612, 0.0
        %622 = vadd.xlane.f32.xlu0 %v621
        %v623 = vpop.xlane.xlu0 %622
        %v624 = vsel %vm590, %v614, 0.0
        %625 = vadd.xlane.f32.xlu0 %v624
        %v626 = vpop.xlane.xlu0 %625
        %v628 = vsel %vm590, %v608, 0
        %630 = vmatprep.subr.mxu0 0.0
        %631 = vmatpush1.msra.mxu0 %v281
        %632 = vmatprep.subr.mxu0 0.0
        %633 = vmatpush1.msra.mxu0 0.0
        %634 = vmatprep.subr.mxu0 0.0
        %635 = vmatpush1.msra.mxu0 0.0
        %636 = vmatprep.subr.mxu0 0.0
        %637 = vmatpush1.msra.mxu0 0.0
        %638 = vmatprep.subr.mxu0 0.0
        %639 = vmatpush1.msra.mxu0 0.0
        %640 = vmatprep.subr.mxu0 0.0
        %641 = vmatpush1.msra.mxu0 0.0
        %642 = vmatprep.subr.mxu0 0.0
        %643 = vmatpush1.msra.mxu0 0.0
        %644 = vmatprep.subr.mxu0 0.0
        %645 = vmatpush1.msra.mxu0 0.0
        %646 = vmatprep.subr.mxu0 0.0
        %647 = vmatpush1.msra.mxu0 0.0
        %648 = vmatprep.subr.mxu0 0.0
        %649 = vmatpush1.msra.mxu0 0.0
        %650 = vmatprep.subr.mxu0 0.0
        %651 = vmatpush1.msra.mxu0 0.0
        %652 = vmatprep.subr.mxu0 0.0
        %653 = vmatpush1.msra.mxu0 0.0
        %654 = vmatprep.subr.mxu0 0.0
        %655 = vmatpush1.msra.mxu0 0.0
        %656 = vmatprep.subr.mxu0 0.0
        %657 = vmatpush1.msra.mxu0 0.0
        %658 = vmatprep.subr.mxu0 0.0
        %659 = vmatpush1.msra.mxu0 0.0
        %660 = vmatprep.subr.mxu0 0.0
        %661 = vmatpush1.msra.mxu0 0.0
        %662 = vmatprep.subr.mxu0 0.0
        %663 = vmatpush1.msra.mxu0 0.0
        %664 = vmatprep.subr.mxu0 0.0
        %665 = vmatpush1.msra.mxu0 0.0
        %666 = vmatprep.subr.mxu0 0.0
        %667 = vmatpush1.msra.mxu0 0.0
        %668 = vmatprep.subr.mxu0 0.0
        %669 = vmatpush1.msra.mxu0 0.0
        %670 = vmatprep.subr.mxu0 0.0
        %671 = vmatpush1.msra.mxu0 0.0
        %672 = vmatprep.subr.mxu0 0.0
        %673 = vmatpush1.msra.mxu0 0.0
        %674 = vmatprep.subr.mxu0 0.0
        %675 = vmatpush1.msra.mxu0 0.0
        %676 = vmatprep.subr.mxu0 0.0
        %677 = vmatpush1.msra.mxu0 0.0
        %678 = vmatprep.subr.mxu0 0.0
        %679 = vmatpush1.msra.mxu0 0.0
        %680 = vmatprep.subr.mxu0 0.0
        %681 = vmatpush1.msra.mxu0 0.0
        %682 = vmatprep.subr.mxu0 0.0
        %683 = vmatpush1.msra.mxu0 0.0
        %684 = vmatprep.subr.mxu0 0.0
        %685 = vmatpush1.msra.mxu0 0.0
        %686 = vmatprep.subr.mxu0 0.0
        %687 = vmatpush1.msra.mxu0 0.0
        %688 = vmatprep.subr.mxu0 0.0
        %689 = vmatpush1.msra.mxu0 0.0
        %690 = vmatprep.subr.mxu0 0.0
        %691 = vmatpush1.msra.mxu0 0.0
        %692 = vmatprep.subr.mxu0 0.0
        %693 = vmatpush1.msra.mxu0 0.0
        %694 = vmatprep.mubr.f32.mxu0 0.0
        %695 = vmatmul.mubr.f32.gmra.mrb[0].mxu0 %v628
        %v696 = vpop.f32.mrb[0].mxu0
        %v697 = vadd.f32 0.0, %v696
        %v698 = vpop.f32.mrb[0].mxu0
        %699 = vdwg.mxu0
        %v701 = vsel %vm590, %v610, 0
        %703 = vmatprep.subr.mxu0 0.0
        %704 = vmatpush1.msra.mxu0 %v282
        %705 = vmatprep.subr.mxu0 0.0
        %706 = vmatpush1.msra.mxu0 0.0
        %707 = vmatprep.subr.mxu0 0.0
        %708 = vmatpush1.msra.mxu0 0.0
        %709 = vmatprep.subr.mxu0 0.0
        %710 = vmatpush1.msra.mxu0 0.0
        %711 = vmatprep.subr.mxu0 0.0
        %712 = vmatpush1.msra.mxu0 0.0
        %713 = vmatprep.subr.mxu0 0.0
        %714 = vmatpush1.msra.mxu0 0.0
        %715 = vmatprep.subr.mxu0 0.0
        %716 = vmatpush1.msra.mxu0 0.0
        %717 = vmatprep.subr.mxu0 0.0
        %718 = vmatpush1.msra.mxu0 0.0
        %719 = vmatprep.subr.mxu0 0.0
        %720 = vmatpush1.msra.mxu0 0.0
        %721 = vmatprep.subr.mxu0 0.0
        %722 = vmatpush1.msra.mxu0 0.0
        %723 = vmatprep.subr.mxu0 0.0
        %724 = vmatpush1.msra.mxu0 0.0
        %725 = vmatprep.subr.mxu0 0.0
        %726 = vmatpush1.msra.mxu0 0.0
        %727 = vmatprep.subr.mxu0 0.0
        %728 = vmatpush1.msra.mxu0 0.0
        %729 = vmatprep.subr.mxu0 0.0
        %730 = vmatpush1.msra.mxu0 0.0
        %731 = vmatprep.subr.mxu0 0.0
        %732 = vmatpush1.msra.mxu0 0.0
        %733 = vmatprep.subr.mxu0 0.0
        %734 = vmatpush1.msra.mxu0 0.0
        %735 = vmatprep.subr.mxu0 0.0
        %736 = vmatpush1.msra.mxu0 0.0
        %737 = vmatprep.subr.mxu0 0.0
        %738 = vmatpush1.msra.mxu0 0.0
        %739 = vmatprep.subr.mxu0 0.0
        %740 = vmatpush1.msra.mxu0 0.0
        %741 = vmatprep.subr.mxu0 0.0
        %742 = vmatpush1.msra.mxu0 0.0
        %743 = vmatprep.subr.mxu0 0.0
        %744 = vmatpush1.msra.mxu0 0.0
        %745 = vmatprep.subr.mxu0 0.0
        %746 = vmatpush1.msra.mxu0 0.0
        %747 = vmatprep.subr.mxu0 0.0
        %748 = vmatpush1.msra.mxu0 0.0
        %749 = vmatprep.subr.mxu0 0.0
        %750 = vmatpush1.msra.mxu0 0.0
        %751 = vmatprep.subr.mxu0 0.0
        %752 = vmatpush1.msra.mxu0 0.0
        %753 = vmatprep.subr.mxu0 0.0
        %754 = vmatpush1.msra.mxu0 0.0
        %755 = vmatprep.subr.mxu0 0.0
        %756 = vmatpush1.msra.mxu0 0.0
        %757 = vmatprep.subr.mxu0 0.0
        %758 = vmatpush1.msra.mxu0 0.0
        %759 = vmatprep.subr.mxu0 0.0
        %760 = vmatpush1.msra.mxu0 0.0
        %761 = vmatprep.subr.mxu0 0.0
        %762 = vmatpush1.msra.mxu0 0.0
        %763 = vmatprep.subr.mxu0 0.0
        %764 = vmatpush1.msra.mxu0 0.0
        %765 = vmatprep.subr.mxu0 0.0
        %766 = vmatpush1.msra.mxu0 0.0
        %767 = vmatprep.mubr.f32.mxu0 0.0
        %768 = vmatmul.mubr.f32.gmra.mrb[0].mxu0 %v701
        %v769 = vpop.f32.mrb[0].mxu0
        %v770 = vadd.f32 0.0, %v769
        %v771 = vpop.f32.mrb[0].mxu0
        %772 = vdwg.mxu0
        %v774 = vsel %vm590, %v612, 0
        %776 = vmatprep.subr.mxu0 0.0
        %777 = vmatpush1.msra.mxu0 %v283
        %778 = vmatprep.subr.mxu0 0.0
        %779 = vmatpush1.msra.mxu0 0.0
        %780 = vmatprep.subr.mxu0 0.0
        %781 = vmatpush1.msra.mxu0 0.0
        %782 = vmatprep.subr.mxu0 0.0
        %783 = vmatpush1.msra.mxu0 0.0
        %784 = vmatprep.subr.mxu0 0.0
        %785 = vmatpush1.msra.mxu0 0.0
        %786 = vmatprep.subr.mxu0 0.0
        %787 = vmatpush1.msra.mxu0 0.0
        %788 = vmatprep.subr.mxu0 0.0
        %789 = vmatpush1.msra.mxu0 0.0
        %790 = vmatprep.subr.mxu0 0.0
        %791 = vmatpush1.msra.mxu0 0.0
        %792 = vmatprep.subr.mxu0 0.0
        %793 = vmatpush1.msra.mxu0 0.0
        %794 = vmatprep.subr.mxu0 0.0
        %795 = vmatpush1.msra.mxu0 0.0
        %796 = vmatprep.subr.mxu0 0.0
        %797 = vmatpush1.msra.mxu0 0.0
        %798 = vmatprep.subr.mxu0 0.0
        %799 = vmatpush1.msra.mxu0 0.0
        %800 = vmatprep.subr.mxu0 0.0
        %801 = vmatpush1.msra.mxu0 0.0
        %802 = vmatprep.subr.mxu0 0.0
        %803 = vmatpush1.msra.mxu0 0.0
        %804 = vmatprep.subr.mxu0 0.0
        %805 = vmatpush1.msra.mxu0 0.0
        %806 = vmatprep.subr.mxu0 0.0
        %807 = vmatpush1.msra.mxu0 0.0
        %808 = vmatprep.subr.mxu0 0.0
        %809 = vmatpush1.msra.mxu0 0.0
        %810 = vmatprep.subr.mxu0 0.0
        %811 = vmatpush1.msra.mxu0 0.0
        %812 = vmatprep.subr.mxu0 0.0
        %813 = vmatpush1.msra.mxu0 0.0
        %814 = vmatprep.subr.mxu0 0.0
        %815 = vmatpush1.msra.mxu0 0.0
        %816 = vmatprep.subr.mxu0 0.0
        %817 = vmatpush1.msra.mxu0 0.0
        %818 = vmatprep.subr.mxu0 0.0
        %819 = vmatpush1.msra.mxu0 0.0
        %820 = vmatprep.subr.mxu0 0.0
        %821 = vmatpush1.msra.mxu0 0.0
        %822 = vmatprep.subr.mxu0 0.0
        %823 = vmatpush1.msra.mxu0 0.0
        %824 = vmatprep.subr.mxu0 0.0
        %825 = vmatpush1.msra.mxu0 0.0
        %826 = vmatprep.subr.mxu0 0.0
        %827 = vmatpush1.msra.mxu0 0.0
        %828 = vmatprep.subr.mxu0 0.0
        %829 = vmatpush1.msra.mxu0 0.0
        %830 = vmatprep.subr.mxu0 0.0
        %831 = vmatpush1.msra.mxu0 0.0
        %832 = vmatprep.subr.mxu0 0.0
        %833 = vmatpush1.msra.mxu0 0.0
        %834 = vmatprep.subr.mxu0 0.0
        %835 = vmatpush1.msra.mxu0 0.0
        %836 = vmatprep.subr.mxu0 0.0
        %837 = vmatpush1.msra.mxu0 0.0
        %838 = vmatprep.subr.mxu0 0.0
        %839 = vmatpush1.msra.mxu0 0.0
        %840 = vmatprep.mubr.f32.mxu0 0.0
        %841 = vmatmul.mubr.f32.gmra.mrb[0].mxu0 %v774
        %v842 = vpop.f32.mrb[0].mxu0
        %v843 = vadd.f32 0.0, %v842
        %v844 = vpop.f32.mrb[0].mxu0
        %845 = vdwg.mxu0
        %v847 = vsel %vm590, %v614, 0
        %849 = vmatprep.subr.mxu0 0.0
        %850 = vmatpush1.msra.mxu0 %v284
        %851 = vmatprep.subr.mxu0 0.0
        %852 = vmatpush1.msra.mxu0 0.0
        %853 = vmatprep.subr.mxu0 0.0
        %854 = vmatpush1.msra.mxu0 0.0
        %855 = vmatprep.subr.mxu0 0.0
        %856 = vmatpush1.msra.mxu0 0.0
        %857 = vmatprep.subr.mxu0 0.0
        %858 = vmatpush1.msra.mxu0 0.0
        %859 = vmatprep.subr.mxu0 0.0
        %860 = vmatpush1.msra.mxu0 0.0
        %861 = vmatprep.subr.mxu0 0.0
        %862 = vmatpush1.msra.mxu0 0.0
        %863 = vmatprep.subr.mxu0 0.0
        %864 = vmatpush1.msra.mxu0 0.0
        %865 = vmatprep.subr.mxu0 0.0
        %866 = vmatpush1.msra.mxu0 0.0
        %867 = vmatprep.subr.mxu0 0.0
        %868 = vmatpush1.msra.mxu0 0.0
        %869 = vmatprep.subr.mxu0 0.0
        %870 = vmatpush1.msra.mxu0 0.0
        %871 = vmatprep.subr.mxu0 0.0
        %872 = vmatpush1.msra.mxu0 0.0
        %873 = vmatprep.subr.mxu0 0.0
        %874 = vmatpush1.msra.mxu0 0.0
        %875 = vmatprep.subr.mxu0 0.0
        %876 = vmatpush1.msra.mxu0 0.0
        %877 = vmatprep.subr.mxu0 0.0
        %878 = vmatpush1.msra.mxu0 0.0
        %879 = vmatprep.subr.mxu0 0.0
        %880 = vmatpush1.msra.mxu0 0.0
        %881 = vmatprep.subr.mxu0 0.0
        %882 = vmatpush1.msra.mxu0 0.0
        %883 = vmatprep.subr.mxu0 0.0
        %884 = vmatpush1.msra.mxu0 0.0
        %885 = vmatprep.subr.mxu0 0.0
        %886 = vmatpush1.msra.mxu0 0.0
        %887 = vmatprep.subr.mxu0 0.0
        %888 = vmatpush1.msra.mxu0 0.0
        %889 = vmatprep.subr.mxu0 0.0
        %890 = vmatpush1.msra.mxu0 0.0
        %891 = vmatprep.subr.mxu0 0.0
        %892 = vmatpush1.msra.mxu0 0.0
        %893 = vmatprep.subr.mxu0 0.0
        %894 = vmatpush1.msra.mxu0 0.0
        %895 = vmatprep.subr.mxu0 0.0
        %896 = vmatpush1.msra.mxu0 0.0
        %897 = vmatprep.subr.mxu0 0.0
        %898 = vmatpush1.msra.mxu0 0.0
        %899 = vmatprep.subr.mxu0 0.0
        %900 = vmatpush1.msra.mxu0 0.0
        %901 = vmatprep.subr.mxu0 0.0
        %902 = vmatpush1.msra.mxu0 0.0
        %903 = vmatprep.subr.mxu0 0.0
        %904 = vmatpush1.msra.mxu0 0.0
        %905 = vmatprep.subr.mxu0 0.0
        %906 = vmatpush1.msra.mxu0 0.0
        %907 = vmatprep.subr.mxu0 0.0
        %908 = vmatpush1.msra.mxu0 0.0
        %909 = vmatprep.subr.mxu0 0.0
        %910 = vmatpush1.msra.mxu0 0.0
        %911 = vmatprep.subr.mxu0 0.0
        %912 = vmatpush1.msra.mxu0 0.0
        %913 = vmatprep.mubr.f32.mxu0 0.0
        %914 = vmatmul.mubr.f32.gmra.mrb[0].mxu0 %v847
        %v915 = vpop.f32.mrb[0].mxu0
        %v916 = vadd.f32 0.0, %v915
        %v917 = vpop.f32.mrb[0].mxu0
        %918 = vdwg.mxu0
        %v919 = vrcp.pop %v617
        %v920 = vrcp.pop %v620
        %v921 = vrcp.pop %v623
        %v922 = vrcp.pop %v626
        %v923 = vmul.f32 %v697, %v919
        %v924 = vmul.f32 %v770, %v920
        %v925 = vmul.f32 %v843, %v921
        %v926 = vmul.f32 %v916, %v922
        %928 = vrot.lane.b32.xlu0 %v924, 32
        %v929 = vpop.permute.xlu0 %928
        %932 = vrot.lane.b32.xlu0 %v925, 64
        %v933 = vpop.permute.xlu0 %932
        %936 = vrot.lane.b32.xlu0 %v926, 96
        %v937 = vpop.permute.xlu0 %936
        %v939 = vsel %vm285, %v923, %v929
        %vm940 = vcmask 523264
        %v941 = vsel %vm940, %v939, %v933
        %vm942 = vcmask 785408
        %v943 = vsel %vm942, %v941, %v937
        %944 = vst [vmem:[%s265] sm:$0xff] %v943
        %s945 = sand.u32 %s109, 1
        %s946 = scalar_lea.sflag [#allocation4], %s945
        %s947 = sand.u32 %s109, 1
        %s948 = smul.addr %s947, 8
        %s949 = scalar_lea.vmem [#allocation8], %s948
        // Predicated region
        $region45: #{tpu_custom_call.1} parent=31 // pred_check
          %p950 = pneg %p119
        $region46: #{tpu_custom_call.1} parent=31 // pred_check_branch
          %952 = sbr.rel (%p950) target = $region48
        $region47: #{tpu_custom_call.1} parent=31 // pred_region
          %s954 = ssub.s32 128, 128
          %955 = vsyncadd %s946, %s954
          %s956 = smul.addr %s23, 128
          %s957 = scalar_lea.hbm %s3, %s956
          %s959 = sshll.u32 %s949, 4
          %s960 = int_to_ptr.vmem [resolvable:$true] %s959
          %962 = dma.vmem_to_hbm [thread:$0]  %s960, 128, %s957, %s946
        $region48: #{tpu_custom_call.1} parent=31 // pred_fallthru
          _
      $region32: #{tpu_custom_call.1} parent=5 // pred_fallthru
        _
      %p963 = scmp.le.s32.totalorder 2, %s18
      // Predicated region
      $region49: #{tpu_custom_call.1} parent=5 // pred_check
        %p964 = pneg %p963
      $region50: #{tpu_custom_call.1} parent=5 // pred_check_branch
        %966 = sbr.rel (%p964) target = $region52
      $region51: #{tpu_custom_call.1} parent=5 // pred_region
        %s967 = ssub.s32 %s18, 2
        // Predicated region
        $region53: #{tpu_custom_call.1} parent=51 // pred_check
          %p968 = pneg %p125
        $region54: #{tpu_custom_call.1} parent=51 // pred_check_branch
          %970 = sbr.rel (%p968) target = $region56
        $region55: #{tpu_custom_call.1} parent=51 // pred_region
          %s971 = sand.u32 %s110, 1
          %s972 = scalar_lea.sflag [#allocation4], %s971
          %s973 = sand.u32 %s110, 1
          %s974 = smul.addr %s973, 8
          %s975 = scalar_lea.vmem [#allocation8], %s974
          %976 = dma.done %s972, 128
        $region56: #{tpu_custom_call.1} parent=51 // pred_fallthru
          _
      $region52: #{tpu_custom_call.1} parent=5 // pred_fallthru
        _
    $region6: #{tpu_custom_call.1} parent=1 // loop_footer
      %s22 = sadd.s32 1, %s18
    $region7: #{tpu_custom_call.1} parent=1 // loop_footer_branch
      %17 = sbr.rel target = $region3
    $region8: #{tpu_custom_call.1} parent=1 // loop_exit
      _
    %977 = vsyncpa [#allocation3], 1
    %s978 = scalar_lea.sflag [#allocation3], 1
    %979 = vsyncpa %s978, 1
    %980 = vsyncpa [#allocation6], 1
    %s981 = scalar_lea.sflag [#allocation6], 1
    %982 = vsyncpa %s981, 1
    %983 = vsyncpa [#allocation4], 1
    %s984 = scalar_lea.sflag [#allocation4], 1
    %985 = vsyncpa %s984, 1

</llo_original>
